<compile_context>
chip_gen: v7x
topology: tpu7x:2x2x1
jax: 0.10.0
libtpu: 0.0.40
codegen_flags: <defaults>
</compile_context>

<pallas_src>
import jax
import jax.numpy as jnp
from jax.experimental import pallas as pl
from jax.experimental.pallas import tpu as pltpu


def _mlp_kernel(x_ref, tcol_ref, w1x_ref, w1t_ref, b1_ref,
                w2_ref, b2_ref, w3_ref, b3_ref, o_ref):
    x = x_ref[...]                              # (TR, D)  f32
    tcol = tcol_ref[...]                        # (TR, 1)  per-row time

    # ---- Layer 1: exact fold of cat([x, t*1], 1) @ W1 + b1 ----------------
    #   x @ W1x  +  t_col * W1t  +  b1        (single small-K MXU matmul)
    h = (jnp.dot(x, w1x_ref[...], preferred_element_type=jnp.float32)
         + tcol * w1t_ref[...] + b1_ref[...])
    h = jnp.tanh(h)                             # (TR, H)

    # ---- Layer 2 (H x H -> MXU) --------------------------------------------
    h = jnp.tanh(jnp.dot(h, w2_ref[...], preferred_element_type=jnp.float32)
                 + b2_ref[...])

    # ---- Layer 3 (output head) ----------------------------------------------
    o = jnp.dot(h, w3_ref[...], preferred_element_type=jnp.float32) + b3_ref[...]
    # TODO(synk): with D=2 this store is lane-sparse (masked vst); if S*B*D
    # grows, emit a (ceil(R*D/128), 128) lane-dense slab and reshape outside.
    o_ref[...] = o.astype(o_ref.dtype)


def _pick_row_tile(r_pad):
    """Largest sublane-aligned row tile that divides r_pad (>= fix applied)."""
    for cand in (2048, 1024, 512, 256, 128, 64, 32, 16, 8):
        if r_pad >= cand and r_pad % cand == 0:
            return cand
    return r_pad  # full-array block (always legal)


def torch_wrapper_tv_forward_fused(ts, xs, params, *, tr=None):
    """Fused multi-evaluation: out[s] = wrapper.forward(ts[s], xs[s]).

    ts: (S,) float32, xs: (S, B, D) float32 -> (S, B, D) float32.
    All S*B rows are flattened and processed in one pallas_call; weights are
    DMA'd once and stay resident in VMEM.
    """
    w1x, w1t, b1, w2, b2, w3, b3 = params
    S, B, D = xs.shape
    H = w2.shape[0]

    R = S * B
    x_flat = xs.reshape(R, D).astype(jnp.float32)
    # Per-row time column: ts[s] broadcast over its B rows (exact concat fold).
    t_col = jnp.broadcast_to(
        jnp.asarray(ts, jnp.float32).reshape(S, 1, 1), (S, B, 1)).reshape(R, 1)

    # Pad rows to an f32 sublane multiple (8) so row tiles are always legal.
    r_pad = ((R + 7) // 8) * 8
    if r_pad != R:
        x_flat = jnp.pad(x_flat, ((0, r_pad - R), (0, 0)))
        t_col = jnp.pad(t_col, ((0, r_pad - R), (0, 0)))

    if tr is None:
        tr = _pick_row_tile(r_pad)
    assert r_pad % tr == 0
    nrt = r_pad // tr

    def row_spec(shape):
        return pl.BlockSpec(shape, lambda i: (i, 0))

    def const_spec(shape):
        # Constant block index -> weight DMA'd once, resident across all tiles.
        return pl.BlockSpec(shape, lambda i: (0, 0))

    out = pl.pallas_call(
        _mlp_kernel,
        out_shape=jax.ShapeDtypeStruct((r_pad, D), jnp.float32),
        grid=(nrt,),
        in_specs=[
            row_spec((tr, D)),      # x  (flattened S*B rows)
            row_spec((tr, 1)),      # per-row t column
            const_spec((D, H)),     # w1x
            const_spec((1, H)),     # w1t
            const_spec((1, H)),     # b1
            const_spec((H, H)),     # w2
            const_spec((1, H)),     # b2
            const_spec((H, D)),     # w3
            const_spec((1, D)),     # b3
        ],
        out_specs=row_spec((tr, D)),
        compiler_params=pltpu.CompilerParams(
            # Row tiles are fully independent -> megacore sharding on v7x
            # whenever nrt >= 2; single-TC chips (v5e/v6e) unaffected.
            dimension_semantics=("parallel",),
        ),
    )(x_flat, t_col, w1x, w1t, b1, w2, b2, w3, b3)

    return out[:R].reshape(S, B, D)


def torch_wrapper_tv_forward(t, x, params):
    """Single-call forward, matching torch_wrapper_tv.forward(t, x) exactly.

    t: () float32 scalar, x: (B, D) float32 -> (B, D) float32.
    """
    ts = jnp.asarray(t, jnp.float32).reshape((1,))
    return torch_wrapper_tv_forward_fused(ts, x[None], params)[0]


def init_params(key, D, H):
    """Deterministic synthetic MLP params: (D+1) -> H -> H -> D."""
    k1, k2, k3 = jax.random.split(key, 3)
    w1 = jax.random.normal(k1, (D + 1, H), jnp.float32) * 0.2
    b1 = jnp.zeros((1, H), jnp.float32)
    w2 = jax.random.normal(k2, (H, H), jnp.float32) * 0.2
    b2 = jnp.zeros((1, H), jnp.float32)
    w3 = jax.random.normal(k3, (H, D), jnp.float32) * 0.2
    b3 = jnp.zeros((1, D), jnp.float32)
    # Split first layer into x-part and t-part (exact concat equivalence).
    w1x = w1[:D, :]                 # (D, H)
    w1t = w1[D:D + 1, :]            # (1, H)
    return (w1x, w1t, b1, w2, b2, w3, b3)


def _reference(ts, xs, params):
    """Pure-JAX reference mirroring the PyTorch wrapper (explicit concat)."""
    w1x, w1t, b1, w2, b2, w3, b3 = params
    w1 = jnp.concatenate([w1x, w1t], axis=0)

    def one(t, x):
        xin = jnp.concatenate([x, jnp.full((x.shape[0], 1), t, jnp.float32)], 1)
        h = jnp.tanh(xin @ w1 + b1)
        h = jnp.tanh(h @ w2 + b2)
        return h @ w3 + b3

    return jax.vmap(one)(ts, xs)


if __name__ == "__main__":
    B, D, H, S = 8, 2, 32, 16   # batch=8, state dim=2, hidden=32, 16 solver steps

    key = jax.random.PRNGKey(0)
    kx, kp = jax.random.split(key)
    xs = jax.random.normal(kx, (S, B, D), jnp.float32)
    ts = jnp.linspace(0.0, 1.0, S).astype(jnp.float32)
    params = init_params(kp, D, H)

    # Fused multi-step evaluation: one pallas_call, one grid step, all rows.
    out_fused = jax.block_until_ready(torch_wrapper_tv_forward_fused(ts, xs, params))
    ref_fused = _reference(ts, xs, params)
    assert out_fused.shape == (S, B, D)
    assert jnp.allclose(out_fused, ref_fused, atol=1e-5, rtol=1e-5)

    # Original single-call module semantics.
    t0 = jnp.float32(0.5)
    x0 = xs[0]
    out_one = jax.block_until_ready(torch_wrapper_tv_forward(t0, x0, params))
    ref_one = _reference(t0.reshape(1), x0[None], params)[0]
    assert out_one.shape == (B, D)
    assert jnp.allclose(out_one, ref_one, atol=1e-5, rtol=1e-5)

    print("KERNEL_OK")
</pallas_src>

<mosaic_0001>
module attributes {stable_mosaic.version = 11 : i64} {
  func.func @_mlp_kernel(%arg0: i32, %arg1: memref<128x2xf32, #tpu.memory_space<vmem>>, %arg2: memref<128x1xf32, #tpu.memory_space<vmem>>, %arg3: memref<2x32xf32, #tpu.memory_space<vmem>>, %arg4: memref<1x32xf32, #tpu.memory_space<vmem>>, %arg5: memref<1x32xf32, #tpu.memory_space<vmem>>, %arg6: memref<32x32xf32, #tpu.memory_space<vmem>>, %arg7: memref<1x32xf32, #tpu.memory_space<vmem>>, %arg8: memref<32x2xf32, #tpu.memory_space<vmem>>, %arg9: memref<1x2xf32, #tpu.memory_space<vmem>>, %arg10: memref<128x2xf32, #tpu.memory_space<vmem>>) attributes {dimension_semantics = [#tpu.dimension_semantics<parallel>], iteration_bounds = array<i64: 1>, scalar_prefetch = 0 : i64, scratch_operands = 0 : i64, tpu.core_type = #tpu.core_type<tc>, window_params = [{transform_indices = @transform_0, window_bounds = array<i64: 128, 2>}, {transform_indices = @transform_1, window_bounds = array<i64: 128, 1>}, {pipeline_mode = #tpu.pipeline_mode<synchronous>, transform_indices = @transform_2, window_bounds = array<i64: 2, 32>}, {pipeline_mode = #tpu.pipeline_mode<synchronous>, transform_indices = @transform_3, window_bounds = array<i64: 1, 32>}, {pipeline_mode = #tpu.pipeline_mode<synchronous>, transform_indices = @transform_4, window_bounds = array<i64: 1, 32>}, {pipeline_mode = #tpu.pipeline_mode<synchronous>, transform_indices = @transform_5, window_bounds = array<i64: 32, 32>}, {pipeline_mode = #tpu.pipeline_mode<synchronous>, transform_indices = @transform_6, window_bounds = array<i64: 1, 32>}, {pipeline_mode = #tpu.pipeline_mode<synchronous>, transform_indices = @transform_7, window_bounds = array<i64: 32, 2>}, {pipeline_mode = #tpu.pipeline_mode<synchronous>, transform_indices = @transform_8, window_bounds = array<i64: 1, 2>}, {transform_indices = @transform_9, window_bounds = array<i64: 128, 2>}]} {
    %c0 = arith.constant 0 : index
    %c0_0 = arith.constant 0 : index
    %0 = vector.load %arg1[%c0, %c0_0] : memref<128x2xf32, #tpu.memory_space<vmem>>, vector<128x2xf32>
    %c0_1 = arith.constant 0 : index
    %c0_2 = arith.constant 0 : index
    %1 = vector.load %arg2[%c0_1, %c0_2] : memref<128x1xf32, #tpu.memory_space<vmem>>, vector<128x1xf32>
    %c0_3 = arith.constant 0 : index
    %c0_4 = arith.constant 0 : index
    %2 = vector.load %arg3[%c0_3, %c0_4] : memref<2x32xf32, #tpu.memory_space<vmem>>, vector<2x32xf32>
    %cst = arith.constant dense<0.000000e+00> : vector<128x32xf32>
    %3 = tpu.matmul %0, %2, %cst {dimension_numbers = #tpu.dot_dimension_numbers<[1], [0], [0], [1], [0, 0, 1, 1], [], []>} : vector<128x2xf32>, vector<2x32xf32>, vector<128x32xf32> -> vector<128x32xf32>
    %c0_5 = arith.constant 0 : index
    %c0_6 = arith.constant 0 : index
    %4 = vector.load %arg4[%c0_5, %c0_6] : memref<1x32xf32, #tpu.memory_space<vmem>>, vector<1x32xf32>
    %5 = vector.broadcast %1 : vector<128x1xf32> to vector<128x32xf32>
    %6 = vector.broadcast %4 : vector<1x32xf32> to vector<128x32xf32>
    %7 = arith.mulf %5, %6 : vector<128x32xf32>
    %8 = arith.addf %3, %7 : vector<128x32xf32>
    %c0_7 = arith.constant 0 : index
    %c0_8 = arith.constant 0 : index
    %9 = vector.load %arg5[%c0_7, %c0_8] : memref<1x32xf32, #tpu.memory_space<vmem>>, vector<1x32xf32>
    %10 = vector.broadcast %9 : vector<1x32xf32> to vector<128x32xf32>
    %11 = arith.addf %8, %10 : vector<128x32xf32>
    %12 = math.tanh %11 : vector<128x32xf32>
    %c0_9 = arith.constant 0 : index
    %c0_10 = arith.constant 0 : index
    %13 = vector.load %arg6[%c0_9, %c0_10] : memref<32x32xf32, #tpu.memory_space<vmem>>, vector<32x32xf32>
    %cst_11 = arith.constant dense<0.000000e+00> : vector<128x32xf32>
    %14 = tpu.matmul %12, %13, %cst_11 {dimension_numbers = #tpu.dot_dimension_numbers<[1], [0], [0], [1], [0, 0, 1, 1], [], []>} : vector<128x32xf32>, vector<32x32xf32>, vector<128x32xf32> -> vector<128x32xf32>
    %c0_12 = arith.constant 0 : index
    %c0_13 = arith.constant 0 : index
    %15 = vector.load %arg7[%c0_12, %c0_13] : memref<1x32xf32, #tpu.memory_space<vmem>>, vector<1x32xf32>
    %16 = vector.broadcast %15 : vector<1x32xf32> to vector<128x32xf32>
    %17 = arith.addf %14, %16 : vector<128x32xf32>
    %18 = math.tanh %17 : vector<128x32xf32>
    %c0_14 = arith.constant 0 : index
    %c0_15 = arith.constant 0 : index
    %19 = vector.load %arg8[%c0_14, %c0_15] : memref<32x2xf32, #tpu.memory_space<vmem>>, vector<32x2xf32>
    %cst_16 = arith.constant dense<0.000000e+00> : vector<128x2xf32>
    %20 = tpu.matmul %18, %19, %cst_16 {dimension_numbers = #tpu.dot_dimension_numbers<[1], [0], [0], [1], [0, 0, 1, 1], [], []>} : vector<128x32xf32>, vector<32x2xf32>, vector<128x2xf32> -> vector<128x2xf32>
    %c0_17 = arith.constant 0 : index
    %c0_18 = arith.constant 0 : index
    %21 = vector.load %arg9[%c0_17, %c0_18] : memref<1x2xf32, #tpu.memory_space<vmem>>, vector<1x2xf32>
    %22 = vector.broadcast %21 : vector<1x2xf32> to vector<128x2xf32>
    %23 = arith.addf %20, %22 : vector<128x2xf32>
    %c0_19 = arith.constant 0 : index
    %c0_20 = arith.constant 0 : index
    %24 = vector.load %arg10[%c0_19, %c0_20] : memref<128x2xf32, #tpu.memory_space<vmem>>, vector<128x2xf32>
    tpu.vector_store %arg10[%c0_19, %c0_20], %23 {strides = array<i32>} : memref<128x2xf32, #tpu.memory_space<vmem>>, vector<128x2xf32>,
    return
  }
  func.func @transform_0(%arg0: i32) -> (i32, i32) {
    %c0_i32 = arith.constant 0 : i32
    %c0_i32_0 = arith.constant 0 : i32
    return %arg0, %c0_i32 : i32, i32
  }
  func.func @transform_1(%arg0: i32) -> (i32, i32) {
    %c0_i32 = arith.constant 0 : i32
    %c0_i32_0 = arith.constant 0 : i32
    return %arg0, %c0_i32 : i32, i32
  }
  func.func @transform_2(%arg0: i32) -> (i32, i32) {
    %c0_i32 = arith.constant 0 : i32
    %c0_i32_0 = arith.constant 0 : i32
    %c0_i32_1 = arith.constant 0 : i32
    return %c0_i32, %c0_i32_0 : i32, i32
  }
  func.func @transform_3(%arg0: i32) -> (i32, i32) {
    %c0_i32 = arith.constant 0 : i32
    %c0_i32_0 = arith.constant 0 : i32
    %c0_i32_1 = arith.constant 0 : i32
    return %c0_i32, %c0_i32_0 : i32, i32
  }
  func.func @transform_4(%arg0: i32) -> (i32, i32) {
    %c0_i32 = arith.constant 0 : i32
    %c0_i32_0 = arith.constant 0 : i32
    %c0_i32_1 = arith.constant 0 : i32
    return %c0_i32, %c0_i32_0 : i32, i32
  }
  func.func @transform_5(%arg0: i32) -> (i32, i32) {
    %c0_i32 = arith.constant 0 : i32
    %c0_i32_0 = arith.constant 0 : i32
    %c0_i32_1 = arith.constant 0 : i32
    return %c0_i32, %c0_i32_0 : i32, i32
  }
  func.func @transform_6(%arg0: i32) -> (i32, i32) {
    %c0_i32 = arith.constant 0 : i32
    %c0_i32_0 = arith.constant 0 : i32
    %c0_i32_1 = arith.constant 0 : i32
    return %c0_i32, %c0_i32_0 : i32, i32
  }
  func.func @transform_7(%arg0: i32) -> (i32, i32) {
    %c0_i32 = arith.constant 0 : i32
    %c0_i32_0 = arith.constant 0 : i32
    %c0_i32_1 = arith.constant 0 : i32
    return %c0_i32, %c0_i32_0 : i32, i32
  }
  func.func @transform_8(%arg0: i32) -> (i32, i32) {
    %c0_i32 = arith.constant 0 : i32
    %c0_i32_0 = arith.constant 0 : i32
    %c0_i32_1 = arith.constant 0 : i32
    return %c0_i32, %c0_i32_0 : i32, i32
  }
  func.func @transform_9(%arg0: i32) -> (i32, i32) {
    %c0_i32 = arith.constant 0 : i32
    %c0_i32_0 = arith.constant 0 : i32
    return %arg0, %c0_i32 : i32, i32
  }
}

</mosaic_0001>

<llo_original>
// kernel: tpu_custom_call.1
$region0: #{tpu_custom_call.1}
  #allocation0 [shape = 'u32[]', space=smem, size = 0x4, offset = 0x4, fixed_abs, tag = 'smem constant byte address 0x4 - core index']
  #allocation1 [shape = 'u32[144,128]{1,0:T(1,128)}', space=vmem, size = 0x12000, scoped, tag = 'internal scratch']
  %s0 = inlined_call_operand.vmem [shape: f32[128,2], index: 0, kind: input, shape index: {}]
  %s1 = inlined_call_operand.vmem [shape: f32[128,1], index: 1, kind: input, shape index: {}]
  %s2 = inlined_call_operand.vmem [shape: f32[2,32], index: 2, kind: input, shape index: {}]
  %s3 = inlined_call_operand.vmem [shape: f32[1,32], index: 3, kind: input, shape index: {}]
  %s4 = inlined_call_operand.vmem [shape: f32[1,32], index: 4, kind: input, shape index: {}]
  %s5 = inlined_call_operand.vmem [shape: f32[32,32], index: 5, kind: input, shape index: {}]
  %s6 = inlined_call_operand.vmem [shape: f32[1,32], index: 6, kind: input, shape index: {}]
  %s7 = inlined_call_operand.vmem [shape: f32[32,2], index: 7, kind: input, shape index: {}]
  %s8 = inlined_call_operand.vmem [shape: f32[1,2], index: 8, kind: input, shape index: {}]
  %s9 = inlined_call_operand.vmem [shape: f32[128,2], index: 9, kind: output, shape index: {}]
  %s10 = sld [smem:[#allocation0]]
  $region46: #{tpu_custom_call.1} parent=0
    _
  %s12 = ssub.s32 1, %s10
  %s13 = scalar_select 0, %s12, %s10
  // Predicated region
  $region2: #{tpu_custom_call.1} parent=0 // pred_check
    _
  $region3: #{tpu_custom_call.1} parent=0 // pred_check_branch
    %15 = sbr.rel (0) target = $region5
  $region4: #{tpu_custom_call.1} parent=0 // pred_region
    _
  $region5: #{tpu_custom_call.1} parent=0 // pred_fallthru
    _
  // Predicated region
  $region6: #{tpu_custom_call.1} parent=0 // pred_check
    _
  $region7: #{tpu_custom_call.1} parent=0 // pred_check_branch
    %17 = sbr.rel (0) target = $region9
  $region8: #{tpu_custom_call.1} parent=0 // pred_region
    _
  $region9: #{tpu_custom_call.1} parent=0 // pred_fallthru
    _
  // Predicated region
  $region10: #{tpu_custom_call.1} parent=0 // pred_check
    _
  $region11: #{tpu_custom_call.1} parent=0 // pred_check_branch
    %19 = sbr.rel (0) target = $region13
  $region12: #{tpu_custom_call.1} parent=0 // pred_region
    _
  $region13: #{tpu_custom_call.1} parent=0 // pred_fallthru
    _
  // Predicated region
  $region14: #{tpu_custom_call.1} parent=0 // pred_check
    _
  $region15: #{tpu_custom_call.1} parent=0 // pred_check_branch
    %21 = sbr.rel (0) target = $region17
  $region16: #{tpu_custom_call.1} parent=0 // pred_region
    _
  $region17: #{tpu_custom_call.1} parent=0 // pred_fallthru
    _
  // Predicated region
  $region18: #{tpu_custom_call.1} parent=0 // pred_check
    _
  $region19: #{tpu_custom_call.1} parent=0 // pred_check_branch
    %23 = sbr.rel (0) target = $region21
  $region20: #{tpu_custom_call.1} parent=0 // pred_region
    _
  $region21: #{tpu_custom_call.1} parent=0 // pred_fallthru
    _
  // Predicated region
  $region22: #{tpu_custom_call.1} parent=0 // pred_check
    _
  $region23: #{tpu_custom_call.1} parent=0 // pred_check_branch
    %25 = sbr.rel (0) target = $region25
  $region24: #{tpu_custom_call.1} parent=0 // pred_region
    _
  $region25: #{tpu_custom_call.1} parent=0 // pred_fallthru
    _
  // Predicated region
  $region26: #{tpu_custom_call.1} parent=0 // pred_check
    _
  $region27: #{tpu_custom_call.1} parent=0 // pred_check_branch
    %27 = sbr.rel (0) target = $region29
  $region28: #{tpu_custom_call.1} parent=0 // pred_region
    _
  $region29: #{tpu_custom_call.1} parent=0 // pred_fallthru
    _
  // Predicated region
  $region30: #{tpu_custom_call.1} parent=0 // pred_check
    _
  $region31: #{tpu_custom_call.1} parent=0 // pred_check_branch
    %29 = sbr.rel (0) target = $region33
  $region32: #{tpu_custom_call.1} parent=0 // pred_region
    _
  $region33: #{tpu_custom_call.1} parent=0 // pred_fallthru
    _
  // Predicated region
  $region34: #{tpu_custom_call.1} parent=0 // pred_check
    _
  $region35: #{tpu_custom_call.1} parent=0 // pred_check_branch
    %31 = sbr.rel (0) target = $region37
  $region36: #{tpu_custom_call.1} parent=0 // pred_region
    _
  $region37: #{tpu_custom_call.1} parent=0 // pred_fallthru
    _
  %v32 = vld [vmem:[%s0] sm:$0xff]
  %v33 = vld [vmem:[%s0 + $0x8] sm:$0xff]
  %v34 = vld [vmem:[%s0 + $0x10] sm:$0xff]
  %v35 = vld [vmem:[%s0 + $0x18] sm:$0xff]
  %v36 = vld [vmem:[%s0 + $0x20] sm:$0xff]
  %v37 = vld [vmem:[%s0 + $0x28] sm:$0xff]
  %v38 = vld [vmem:[%s0 + $0x30] sm:$0xff]
  %v39 = vld [vmem:[%s0 + $0x38] sm:$0xff]
  %v40 = vld [vmem:[%s0 + $0x40] sm:$0xff]
  %v41 = vld [vmem:[%s0 + $0x48] sm:$0xff]
  %v42 = vld [vmem:[%s0 + $0x50] sm:$0xff]
  %v43 = vld [vmem:[%s0 + $0x58] sm:$0xff]
  %v44 = vld [vmem:[%s0 + $0x60] sm:$0xff]
  %v45 = vld [vmem:[%s0 + $0x68] sm:$0xff]
  %v46 = vld [vmem:[%s0 + $0x70] sm:$0xff]
  %v47 = vld [vmem:[%s0 + $0x78] sm:$0xff]
  %v48 = vld [vmem:[%s1] sm:$0xff]
  %v49 = vld [vmem:[%s1 + $0x8] sm:$0xff]
  %v50 = vld [vmem:[%s1 + $0x10] sm:$0xff]
  %v51 = vld [vmem:[%s1 + $0x18] sm:$0xff]
  %v52 = vld [vmem:[%s1 + $0x20] sm:$0xff]
  %v53 = vld [vmem:[%s1 + $0x28] sm:$0xff]
  %v54 = vld [vmem:[%s1 + $0x30] sm:$0xff]
  %v55 = vld [vmem:[%s1 + $0x38] sm:$0xff]
  %v56 = vld [vmem:[%s1 + $0x40] sm:$0xff]
  %v57 = vld [vmem:[%s1 + $0x48] sm:$0xff]
  %v58 = vld [vmem:[%s1 + $0x50] sm:$0xff]
  %v59 = vld [vmem:[%s1 + $0x58] sm:$0xff]
  %v60 = vld [vmem:[%s1 + $0x60] sm:$0xff]
  %v61 = vld [vmem:[%s1 + $0x68] sm:$0xff]
  %v62 = vld [vmem:[%s1 + $0x70] sm:$0xff]
  %v63 = vld [vmem:[%s1 + $0x78] sm:$0xff]
  %v64 = vld [vmem:[%s2] sm:$0x3]
  %v65 = vld [vmem:[%s3] sm:$0x1]
  %67 = vset.pattern.permute.xlu0 0
  %68 = vperm.xlu0 %67, %v48
  %v69 = vpop.permute.xlu0 %68
  %72 = vset.pattern.permute.xlu0 0
  %73 = vperm.xlu0 %72, %v49
  %v74 = vpop.permute.xlu0 %73
  %77 = vset.pattern.permute.xlu0 0
  %78 = vperm.xlu0 %77, %v50
  %v79 = vpop.permute.xlu0 %78
  %82 = vset.pattern.permute.xlu0 0
  %83 = vperm.xlu0 %82, %v51
  %v84 = vpop.permute.xlu0 %83
  %87 = vset.pattern.permute.xlu0 0
  %88 = vperm.xlu0 %87, %v52
  %v89 = vpop.permute.xlu0 %88
  %92 = vset.pattern.permute.xlu0 0
  %93 = vperm.xlu0 %92, %v53
  %v94 = vpop.permute.xlu0 %93
  %97 = vset.pattern.permute.xlu0 0
  %98 = vperm.xlu0 %97, %v54
  %v99 = vpop.permute.xlu0 %98
  %102 = vset.pattern.permute.xlu0 0
  %103 = vperm.xlu0 %102, %v55
  %v104 = vpop.permute.xlu0 %103
  %107 = vset.pattern.permute.xlu0 0
  %108 = vperm.xlu0 %107, %v56
  %v109 = vpop.permute.xlu0 %108
  %112 = vset.pattern.permute.xlu0 0
  %113 = vperm.xlu0 %112, %v57
  %v114 = vpop.permute.xlu0 %113
  %117 = vset.pattern.permute.xlu0 0
  %118 = vperm.xlu0 %117, %v58
  %v119 = vpop.permute.xlu0 %118
  %122 = vset.pattern.permute.xlu0 0
  %123 = vperm.xlu0 %122, %v59
  %v124 = vpop.permute.xlu0 %123
  %127 = vset.pattern.permute.xlu0 0
  %128 = vperm.xlu0 %127, %v60
  %v129 = vpop.permute.xlu0 %128
  %132 = vset.pattern.permute.xlu0 0
  %133 = vperm.xlu0 %132, %v61
  %v134 = vpop.permute.xlu0 %133
  %137 = vset.pattern.permute.xlu0 0
  %138 = vperm.xlu0 %137, %v62
  %v139 = vpop.permute.xlu0 %138
  %142 = vset.pattern.permute.xlu0 0
  %143 = vperm.xlu0 %142, %v63
  %v144 = vpop.permute.xlu0 %143
  %v147 = vlaneseq
  %v148 = vshrl.u32 %v147, 7
  %v149 = vsub.s32 0, %v148
  %v150 = vrot.slane %v65, %v149
  %v152 = vmul.f32 %v69, %v150
  %v153 = vmul.f32 %v74, %v150
  %v154 = vmul.f32 %v79, %v150
  %v155 = vmul.f32 %v84, %v150
  %v156 = vmul.f32 %v89, %v150
  %v157 = vmul.f32 %v94, %v150
  %v158 = vmul.f32 %v99, %v150
  %v159 = vmul.f32 %v104, %v150
  %v160 = vmul.f32 %v109, %v150
  %v161 = vmul.f32 %v114, %v150
  %v162 = vmul.f32 %v119, %v150
  %v163 = vmul.f32 %v124, %v150
  %v164 = vmul.f32 %v129, %v150
  %v165 = vmul.f32 %v134, %v150
  %v166 = vmul.f32 %v139, %v150
  %v167 = vmul.f32 %v144, %v150
  %vm168 = vcmask 15360
  %v170 = vsel %vm168, %v32, 0
  %v173 = vsel %vm168, %v33, 0
  %v176 = vsel %vm168, %v34, 0
  %v179 = vsel %vm168, %v35, 0
  %v182 = vsel %vm168, %v36, 0
  %v185 = vsel %vm168, %v37, 0
  %v188 = vsel %vm168, %v38, 0
  %v191 = vsel %vm168, %v39, 0
  %v194 = vsel %vm168, %v40, 0
  %v197 = vsel %vm168, %v41, 0
  %v200 = vsel %vm168, %v42, 0
  %v203 = vsel %vm168, %v43, 0
  %v206 = vsel %vm168, %v44, 0
  %v209 = vsel %vm168, %v45, 0
  %v212 = vsel %vm168, %v46, 0
  %v215 = vsel %vm168, %v47, 0
  %vm217 = vcmask 1041408
  %v219 = vsel %vm217, %v64, 0
  %221 = vmatprep.subr.mxu0 0.0
  %222 = vmatpush1.msra.mxu0 %v219
  %223 = vmatprep.subr.mxu0 0.0
  %224 = vmatpush1.msra.mxu0 0.0
  %225 = vmatprep.subr.mxu0 0.0
  %226 = vmatpush1.msra.mxu0 0.0
  %227 = vmatprep.subr.mxu0 0.0
  %228 = vmatpush1.msra.mxu0 0.0
  %229 = vmatprep.subr.mxu0 0.0
  %230 = vmatpush1.msra.mxu0 0.0
  %231 = vmatprep.subr.mxu0 0.0
  %232 = vmatpush1.msra.mxu0 0.0
  %233 = vmatprep.subr.mxu0 0.0
  %234 = vmatpush1.msra.mxu0 0.0
  %235 = vmatprep.subr.mxu0 0.0
  %236 = vmatpush1.msra.mxu0 0.0
  %237 = vmatprep.subr.mxu0 0.0
  %238 = vmatpush1.msra.mxu0 0.0
  %239 = vmatprep.subr.mxu0 0.0
  %240 = vmatpush1.msra.mxu0 0.0
  %241 = vmatprep.subr.mxu0 0.0
  %242 = vmatpush1.msra.mxu0 0.0
  %243 = vmatprep.subr.mxu0 0.0
  %244 = vmatpush1.msra.mxu0 0.0
  %245 = vmatprep.subr.mxu0 0.0
  %246 = vmatpush1.msra.mxu0 0.0
  %247 = vmatprep.subr.mxu0 0.0
  %248 = vmatpush1.msra.mxu0 0.0
  %249 = vmatprep.subr.mxu0 0.0
  %250 = vmatpush1.msra.mxu0 0.0
  %251 = vmatprep.subr.mxu0 0.0
  %252 = vmatpush1.msra.mxu0 0.0
  %253 = vmatprep.subr.mxu0 0.0
  %254 = vmatpush1.msra.mxu0 0.0
  %255 = vmatprep.subr.mxu0 0.0
  %256 = vmatpush1.msra.mxu0 0.0
  %257 = vmatprep.subr.mxu0 0.0
  %258 = vmatpush1.msra.mxu0 0.0
  %259 = vmatprep.subr.mxu0 0.0
  %260 = vmatpush1.msra.mxu0 0.0
  %261 = vmatprep.subr.mxu0 0.0
  %262 = vmatpush1.msra.mxu0 0.0
  %263 = vmatprep.subr.mxu0 0.0
  %264 = vmatpush1.msra.mxu0 0.0
  %265 = vmatprep.subr.mxu0 0.0
  %266 = vmatpush1.msra.mxu0 0.0
  %267 = vmatprep.subr.mxu0 0.0
  %268 = vmatpush1.msra.mxu0 0.0
  %269 = vmatprep.subr.mxu0 0.0
  %270 = vmatpush1.msra.mxu0 0.0
  %271 = vmatprep.subr.mxu0 0.0
  %272 = vmatpush1.msra.mxu0 0.0
  %273 = vmatprep.subr.mxu0 0.0
  %274 = vmatpush1.msra.mxu0 0.0
  %275 = vmatprep.subr.mxu0 0.0
  %276 = vmatpush1.msra.mxu0 0.0
  %277 = vmatprep.subr.mxu0 0.0
  %278 = vmatpush1.msra.mxu0 0.0
  %279 = vmatprep.subr.mxu0 0.0
  %280 = vmatpush1.msra.mxu0 0.0
  %281 = vmatprep.subr.mxu0 0.0
  %282 = vmatpush1.msra.mxu0 0.0
  %283 = vmatprep.subr.mxu0 0.0
  %284 = vmatpush1.msra.mxu0 0.0
  %285 = vmatprep.mubr.f32.mxu0 0.0
  %286 = vmatmul.mubr.f32.gmra.mrb[0].mxu0 %v170
  %v287 = vpop.f32.mrb[0].mxu0
  %v288 = vadd.f32 %v152, %v287
  %v289 = vpop.f32.mrb[0].mxu0
  %290 = vmatprep.mubr.f32.mxu0 0.0
  %291 = vmatmul.mubr.f32.gmra.mrb[0].mxu0 %v173
  %v292 = vpop.f32.mrb[0].mxu0
  %v293 = vadd.f32 %v153, %v292
  %v294 = vpop.f32.mrb[0].mxu0
  %295 = vmatprep.mubr.f32.mxu0 0.0
  %296 = vmatmul.mubr.f32.gmra.mrb[0].mxu0 %v176
  %v297 = vpop.f32.mrb[0].mxu0
  %v298 = vadd.f32 %v154, %v297
  %v299 = vpop.f32.mrb[0].mxu0
  %300 = vmatprep.mubr.f32.mxu0 0.0
  %301 = vmatmul.mubr.f32.gmra.mrb[0].mxu0 %v179
  %v302 = vpop.f32.mrb[0].mxu0
  %v303 = vadd.f32 %v155, %v302
  %v304 = vpop.f32.mrb[0].mxu0
  %305 = vmatprep.mubr.f32.mxu0 0.0
  %306 = vmatmul.mubr.f32.gmra.mrb[0].mxu0 %v182
  %v307 = vpop.f32.mrb[0].mxu0
  %v308 = vadd.f32 %v156, %v307
  %v309 = vpop.f32.mrb[0].mxu0
  %310 = vmatprep.mubr.f32.mxu0 0.0
  %311 = vmatmul.mubr.f32.gmra.mrb[0].mxu0 %v185
  %v312 = vpop.f32.mrb[0].mxu0
  %v313 = vadd.f32 %v157, %v312
  %v314 = vpop.f32.mrb[0].mxu0
  %315 = vmatprep.mubr.f32.mxu0 0.0
  %316 = vmatmul.mubr.f32.gmra.mrb[0].mxu0 %v188
  %v317 = vpop.f32.mrb[0].mxu0
  %v318 = vadd.f32 %v158, %v317
  %v319 = vpop.f32.mrb[0].mxu0
  %320 = vmatprep.mubr.f32.mxu0 0.0
  %321 = vmatmul.mubr.f32.gmra.mrb[0].mxu0 %v191
  %v322 = vpop.f32.mrb[0].mxu0
  %v323 = vadd.f32 %v159, %v322
  %v324 = vpop.f32.mrb[0].mxu0
  %325 = vmatprep.mubr.f32.mxu0 0.0
  %326 = vmatmul.mubr.f32.gmra.mrb[0].mxu0 %v194
  %v327 = vpop.f32.mrb[0].mxu0
  %v328 = vadd.f32 %v160, %v327
  %v329 = vpop.f32.mrb[0].mxu0
  %330 = vmatprep.mubr.f32.mxu0 0.0
  %331 = vmatmul.mubr.f32.gmra.mrb[0].mxu0 %v197
  %v332 = vpop.f32.mrb[0].mxu0
  %v333 = vadd.f32 %v161, %v332
  %v334 = vpop.f32.mrb[0].mxu0
  %335 = vmatprep.mubr.f32.mxu0 0.0
  %336 = vmatmul.mubr.f32.gmra.mrb[0].mxu0 %v200
  %v337 = vpop.f32.mrb[0].mxu0
  %v338 = vadd.f32 %v162, %v337
  %v339 = vpop.f32.mrb[0].mxu0
  %340 = vmatprep.mubr.f32.mxu0 0.0
  %341 = vmatmul.mubr.f32.gmra.mrb[0].mxu0 %v203
  %v342 = vpop.f32.mrb[0].mxu0
  %v343 = vadd.f32 %v163, %v342
  %v344 = vpop.f32.mrb[0].mxu0
  %345 = vmatprep.mubr.f32.mxu0 0.0
  %346 = vmatmul.mubr.f32.gmra.mrb[0].mxu0 %v206
  %v347 = vpop.f32.mrb[0].mxu0
  %v348 = vadd.f32 %v164, %v347
  %v349 = vpop.f32.mrb[0].mxu0
  %350 = vmatprep.mubr.f32.mxu0 0.0
  %351 = vmatmul.mubr.f32.gmra.mrb[0].mxu0 %v209
  %v352 = vpop.f32.mrb[0].mxu0
  %v353 = vadd.f32 %v165, %v352
  %v354 = vpop.f32.mrb[0].mxu0
  %355 = vmatprep.mubr.f32.mxu0 0.0
  %356 = vmatmul.mubr.f32.gmra.mrb[0].mxu0 %v212
  %v357 = vpop.f32.mrb[0].mxu0
  %v358 = vadd.f32 %v166, %v357
  %v359 = vpop.f32.mrb[0].mxu0
  %360 = vmatprep.mubr.f32.mxu0 0.0
  %361 = vmatmul.mubr.f32.gmra.mrb[0].mxu0 %v215
  %v362 = vpop.f32.mrb[0].mxu0
  %v363 = vadd.f32 %v167, %v362
  %v364 = vpop.f32.mrb[0].mxu0
  %365 = vdwg.mxu0
  %v366 = vld [vmem:[%s4] sm:$0x1]
  %v368 = vlaneseq
  %v369 = vshrl.u32 %v368, 7
  %v370 = vsub.s32 0, %v369
  %v371 = vrot.slane %v366, %v370
  %v373 = vadd.f32 %v288, %v371
  %v374 = vadd.f32 %v293, %v371
  %v375 = vadd.f32 %v298, %v371
  %v376 = vadd.f32 %v303, %v371
  %v377 = vadd.f32 %v308, %v371
  %v378 = vadd.f32 %v313, %v371
  %v379 = vadd.f32 %v318, %v371
  %v380 = vadd.f32 %v323, %v371
  %v381 = vadd.f32 %v328, %v371
  %v382 = vadd.f32 %v333, %v371
  %v383 = vadd.f32 %v338, %v371
  %v384 = vadd.f32 %v343, %v371
  %v385 = vadd.f32 %v348, %v371
  %v386 = vadd.f32 %v353, %v371
  %v387 = vadd.f32 %v358, %v371
  %v388 = vadd.f32 %v363, %v371
  %v389 = vtanh.pop %v373
  %v390 = vtanh.pop %v374
  %v391 = vtanh.pop %v375
  %v392 = vtanh.pop %v376
  %v393 = vtanh.pop %v377
  %v394 = vtanh.pop %v378
  %v395 = vtanh.pop %v379
  %v396 = vtanh.pop %v380
  %v397 = vtanh.pop %v381
  %v398 = vtanh.pop %v382
  %v399 = vtanh.pop %v383
  %v400 = vtanh.pop %v384
  %v401 = vtanh.pop %v385
  %v402 = vtanh.pop %v386
  %v403 = vtanh.pop %v387
  %v404 = vtanh.pop %v388
  %v405 = vld [vmem:[%s5] sm:$0xff]
  %v406 = vld [vmem:[%s5 + $0x8] sm:$0xff]
  %v407 = vld [vmem:[%s5 + $0x10] sm:$0xff]
  %v408 = vld [vmem:[%s5 + $0x18] sm:$0xff]
  %v409 = vld [vmem:[%s6] sm:$0x1]
  %v411 = vlaneseq
  %v412 = vshrl.u32 %v411, 7
  %v413 = vsub.s32 0, %v412
  %v414 = vrot.slane %v409, %v413
  %vm416 = vcmask 261120
  %v418 = vsel %vm416, %v389, 0
  %v421 = vsel %vm416, %v390, 0
  %v424 = vsel %vm416, %v391, 0
  %v427 = vsel %vm416, %v392, 0
  %v430 = vsel %vm416, %v393, 0
  %v433 = vsel %vm416, %v394, 0
  %v436 = vsel %vm416, %v395, 0
  %v439 = vsel %vm416, %v396, 0
  %v442 = vsel %vm416, %v397, 0
  %v445 = vsel %vm416, %v398, 0
  %v448 = vsel %vm416, %v399, 0
  %v451 = vsel %vm416, %v400, 0
  %v454 = vsel %vm416, %v401, 0
  %v457 = vsel %vm416, %v402, 0
  %v460 = vsel %vm416, %v403, 0
  %v463 = vsel %vm416, %v404, 0
  %465 = vmatprep.subr.mxu0 0.0
  %466 = vmatpush1.msra.mxu0 %v405
  %467 = vmatprep.subr.mxu0 0.0
  %468 = vmatpush1.msra.mxu0 %v406
  %469 = vmatprep.subr.mxu0 0.0
  %470 = vmatpush1.msra.mxu0 %v407
  %471 = vmatprep.subr.mxu0 0.0
  %472 = vmatpush1.msra.mxu0 %v408
  %473 = vmatprep.subr.mxu0 0.0
  %474 = vmatpush1.msra.mxu0 0.0
  %475 = vmatprep.subr.mxu0 0.0
  %476 = vmatpush1.msra.mxu0 0.0
  %477 = vmatprep.subr.mxu0 0.0
  %478 = vmatpush1.msra.mxu0 0.0
  %479 = vmatprep.subr.mxu0 0.0
  %480 = vmatpush1.msra.mxu0 0.0
  %481 = vmatprep.subr.mxu0 0.0
  %482 = vmatpush1.msra.mxu0 0.0
  %483 = vmatprep.subr.mxu0 0.0
  %484 = vmatpush1.msra.mxu0 0.0
  %485 = vmatprep.subr.mxu0 0.0
  %486 = vmatpush1.msra.mxu0 0.0
  %487 = vmatprep.subr.mxu0 0.0
  %488 = vmatpush1.msra.mxu0 0.0
  %489 = vmatprep.subr.mxu0 0.0
  %490 = vmatpush1.msra.mxu0 0.0
  %491 = vmatprep.subr.mxu0 0.0
  %492 = vmatpush1.msra.mxu0 0.0
  %493 = vmatprep.subr.mxu0 0.0
  %494 = vmatpush1.msra.mxu0 0.0
  %495 = vmatprep.subr.mxu0 0.0
  %496 = vmatpush1.msra.mxu0 0.0
  %497 = vmatprep.subr.mxu0 0.0
  %498 = vmatpush1.msra.mxu0 0.0
  %499 = vmatprep.subr.mxu0 0.0
  %500 = vmatpush1.msra.mxu0 0.0
  %501 = vmatprep.subr.mxu0 0.0
  %502 = vmatpush1.msra.mxu0 0.0
  %503 = vmatprep.subr.mxu0 0.0
  %504 = vmatpush1.msra.mxu0 0.0
  %505 = vmatprep.subr.mxu0 0.0
  %506 = vmatpush1.msra.mxu0 0.0
  %507 = vmatprep.subr.mxu0 0.0
  %508 = vmatpush1.msra.mxu0 0.0
  %509 = vmatprep.subr.mxu0 0.0
  %510 = vmatpush1.msra.mxu0 0.0
  %511 = vmatprep.subr.mxu0 0.0
  %512 = vmatpush1.msra.mxu0 0.0
  %513 = vmatprep.subr.mxu0 0.0
  %514 = vmatpush1.msra.mxu0 0.0
  %515 = vmatprep.subr.mxu0 0.0
  %516 = vmatpush1.msra.mxu0 0.0
  %517 = vmatprep.subr.mxu0 0.0
  %518 = vmatpush1.msra.mxu0 0.0
  %519 = vmatprep.subr.mxu0 0.0
  %520 = vmatpush1.msra.mxu0 0.0
  %521 = vmatprep.subr.mxu0 0.0
  %522 = vmatpush1.msra.mxu0 0.0
  %523 = vmatprep.subr.mxu0 0.0
  %524 = vmatpush1.msra.mxu0 0.0
  %525 = vmatprep.subr.mxu0 0.0
  %526 = vmatpush1.msra.mxu0 0.0
  %527 = vmatprep.subr.mxu0 0.0
  %528 = vmatpush1.msra.mxu0 0.0
  %529 = vmatprep.mubr.f32.mxu0 0.0
  %530 = vmatmul.mubr.f32.gmra.mrb[0].mxu0 %v418
  %v531 = vpop.f32.mrb[0].mxu0
  %v532 = vadd.f32 %v414, %v531
  %v533 = vpop.f32.mrb[0].mxu0
  %534 = vmatprep.mubr.f32.mxu0 0.0
  %535 = vmatmul.mubr.f32.gmra.mrb[0].mxu0 %v421
  %v536 = vpop.f32.mrb[0].mxu0
  %v537 = vadd.f32 %v414, %v536
  %v538 = vpop.f32.mrb[0].mxu0
  %539 = vmatprep.mubr.f32.mxu0 0.0
  %540 = vmatmul.mubr.f32.gmra.mrb[0].mxu0 %v424
  %v541 = vpop.f32.mrb[0].mxu0
  %v542 = vadd.f32 %v414, %v541
  %v543 = vpop.f32.mrb[0].mxu0
  %544 = vmatprep.mubr.f32.mxu0 0.0
  %545 = vmatmul.mubr.f32.gmra.mrb[0].mxu0 %v427
  %v546 = vpop.f32.mrb[0].mxu0
  %v547 = vadd.f32 %v414, %v546
  %v548 = vpop.f32.mrb[0].mxu0
  %549 = vmatprep.mubr.f32.mxu0 0.0
  %550 = vmatmul.mubr.f32.gmra.mrb[0].mxu0 %v430
  %v551 = vpop.f32.mrb[0].mxu0
  %v552 = vadd.f32 %v414, %v551
  %v553 = vpop.f32.mrb[0].mxu0
  %554 = vmatprep.mubr.f32.mxu0 0.0
  %555 = vmatmul.mubr.f32.gmra.mrb[0].mxu0 %v433
  %v556 = vpop.f32.mrb[0].mxu0
  %v557 = vadd.f32 %v414, %v556
  %v558 = vpop.f32.mrb[0].mxu0
  %559 = vmatprep.mubr.f32.mxu0 0.0
  %560 = vmatmul.mubr.f32.gmra.mrb[0].mxu0 %v436
  %v561 = vpop.f32.mrb[0].mxu0
  %v562 = vadd.f32 %v414, %v561
  %v563 = vpop.f32.mrb[0].mxu0
  %564 = vmatprep.mubr.f32.mxu0 0.0
  %565 = vmatmul.mubr.f32.gmra.mrb[0].mxu0 %v439
  %v566 = vpop.f32.mrb[0].mxu0
  %v567 = vadd.f32 %v414, %v566
  %v568 = vpop.f32.mrb[0].mxu0
  %569 = vmatprep.mubr.f32.mxu0 0.0
  %570 = vmatmul.mubr.f32.gmra.mrb[0].mxu0 %v442
  %v571 = vpop.f32.mrb[0].mxu0
  %v572 = vadd.f32 %v414, %v571
  %v573 = vpop.f32.mrb[0].mxu0
  %574 = vmatprep.mubr.f32.mxu0 0.0
  %575 = vmatmul.mubr.f32.gmra.mrb[0].mxu0 %v445
  %v576 = vpop.f32.mrb[0].mxu0
  %v577 = vadd.f32 %v414, %v576
  %v578 = vpop.f32.mrb[0].mxu0
  %579 = vmatprep.mubr.f32.mxu0 0.0
  %580 = vmatmul.mubr.f32.gmra.mrb[0].mxu0 %v448
  %v581 = vpop.f32.mrb[0].mxu0
  %v582 = vadd.f32 %v414, %v581
  %v583 = vpop.f32.mrb[0].mxu0
  %584 = vmatprep.mubr.f32.mxu0 0.0
  %585 = vmatmul.mubr.f32.gmra.mrb[0].mxu0 %v451
  %v586 = vpop.f32.mrb[0].mxu0
  %v587 = vadd.f32 %v414, %v586
  %v588 = vpop.f32.mrb[0].mxu0
  %589 = vmatprep.mubr.f32.mxu0 0.0
  %590 = vmatmul.mubr.f32.gmra.mrb[0].mxu0 %v454
  %v591 = vpop.f32.mrb[0].mxu0
  %v592 = vadd.f32 %v414, %v591
  %v593 = vpop.f32.mrb[0].mxu0
  %594 = vmatprep.mubr.f32.mxu0 0.0
  %595 = vmatmul.mubr.f32.gmra.mrb[0].mxu0 %v457
  %v596 = vpop.f32.mrb[0].mxu0
  %v597 = vadd.f32 %v414, %v596
  %v598 = vpop.f32.mrb[0].mxu0
  %599 = vmatprep.mubr.f32.mxu0 0.0
  %600 = vmatmul.mubr.f32.gmra.mrb[0].mxu0 %v460
  %v601 = vpop.f32.mrb[0].mxu0
  %v602 = vadd.f32 %v414, %v601
  %v603 = vpop.f32.mrb[0].mxu0
  %604 = vmatprep.mubr.f32.mxu0 0.0
  %605 = vmatmul.mubr.f32.gmra.mrb[0].mxu0 %v463
  %v606 = vpop.f32.mrb[0].mxu0
  %v607 = vadd.f32 %v414, %v606
  %v608 = vpop.f32.mrb[0].mxu0
  %609 = vdwg.mxu0
  %v610 = vtanh.pop %v532
  %v611 = vtanh.pop %v537
  %v612 = vtanh.pop %v542
  %v613 = vtanh.pop %v547
  %v614 = vtanh.pop %v552
  %v615 = vtanh.pop %v557
  %v616 = vtanh.pop %v562
  %v617 = vtanh.pop %v567
  %v618 = vtanh.pop %v572
  %v619 = vtanh.pop %v577
  %v620 = vtanh.pop %v582
  %v621 = vtanh.pop %v587
  %v622 = vtanh.pop %v592
  %v623 = vtanh.pop %v597
  %v624 = vtanh.pop %v602
  %v625 = vtanh.pop %v607
  %v626 = vld [vmem:[%s7] sm:$0xff]
  %v627 = vld [vmem:[%s7 + $0x8] sm:$0xff]
  %v628 = vld [vmem:[%s7 + $0x10] sm:$0xff]
  %v629 = vld [vmem:[%s7 + $0x18] sm:$0xff]
  %v630 = vld [vmem:[%s8] sm:$0x1]
  %v632 = vlaneseq
  %v633 = vshrl.u32 %v632, 7
  %v634 = vsub.s32 0, %v633
  %v635 = vrot.slane %v630, %v634
  %v638 = vsel %vm416, %v610, 0
  %v641 = vsel %vm416, %v611, 0
  %v644 = vsel %vm416, %v612, 0
  %v647 = vsel %vm416, %v613, 0
  %v650 = vsel %vm416, %v614, 0
  %v653 = vsel %vm416, %v615, 0
  %v656 = vsel %vm416, %v616, 0
  %v659 = vsel %vm416, %v617, 0
  %v662 = vsel %vm416, %v618, 0
  %v665 = vsel %vm416, %v619, 0
  %v668 = vsel %vm416, %v620, 0
  %v671 = vsel %vm416, %v621, 0
  %v674 = vsel %vm416, %v622, 0
  %v677 = vsel %vm416, %v623, 0
  %v680 = vsel %vm416, %v624, 0
  %v683 = vsel %vm416, %v625, 0
  %685 = vmatprep.subr.mxu0 0.0
  %686 = vmatpush1.msra.mxu0 %v626
  %687 = vmatprep.subr.mxu0 0.0
  %688 = vmatpush1.msra.mxu0 %v627
  %689 = vmatprep.subr.mxu0 0.0
  %690 = vmatpush1.msra.mxu0 %v628
  %691 = vmatprep.subr.mxu0 0.0
  %692 = vmatpush1.msra.mxu0 %v629
  %693 = vmatprep.subr.mxu0 0.0
  %694 = vmatpush1.msra.mxu0 0.0
  %695 = vmatprep.subr.mxu0 0.0
  %696 = vmatpush1.msra.mxu0 0.0
  %697 = vmatprep.subr.mxu0 0.0
  %698 = vmatpush1.msra.mxu0 0.0
  %699 = vmatprep.subr.mxu0 0.0
  %700 = vmatpush1.msra.mxu0 0.0
  %701 = vmatprep.subr.mxu0 0.0
  %702 = vmatpush1.msra.mxu0 0.0
  %703 = vmatprep.subr.mxu0 0.0
  %704 = vmatpush1.msra.mxu0 0.0
  %705 = vmatprep.subr.mxu0 0.0
  %706 = vmatpush1.msra.mxu0 0.0
  %707 = vmatprep.subr.mxu0 0.0
  %708 = vmatpush1.msra.mxu0 0.0
  %709 = vmatprep.subr.mxu0 0.0
  %710 = vmatpush1.msra.mxu0 0.0
  %711 = vmatprep.subr.mxu0 0.0
  %712 = vmatpush1.msra.mxu0 0.0
  %713 = vmatprep.subr.mxu0 0.0
  %714 = vmatpush1.msra.mxu0 0.0
  %715 = vmatprep.subr.mxu0 0.0
  %716 = vmatpush1.msra.mxu0 0.0
  %717 = vmatprep.subr.mxu0 0.0
  %718 = vmatpush1.msra.mxu0 0.0
  %719 = vmatprep.subr.mxu0 0.0
  %720 = vmatpush1.msra.mxu0 0.0
  %721 = vmatprep.subr.mxu0 0.0
  %722 = vmatpush1.msra.mxu0 0.0
  %723 = vmatprep.subr.mxu0 0.0
  %724 = vmatpush1.msra.mxu0 0.0
  %725 = vmatprep.subr.mxu0 0.0
  %726 = vmatpush1.msra.mxu0 0.0
  %727 = vmatprep.subr.mxu0 0.0
  %728 = vmatpush1.msra.mxu0 0.0
  %729 = vmatprep.subr.mxu0 0.0
  %730 = vmatpush1.msra.mxu0 0.0
  %731 = vmatprep.subr.mxu0 0.0
  %732 = vmatpush1.msra.mxu0 0.0
  %733 = vmatprep.subr.mxu0 0.0
  %734 = vmatpush1.msra.mxu0 0.0
  %735 = vmatprep.subr.mxu0 0.0
  %736 = vmatpush1.msra.mxu0 0.0
  %737 = vmatprep.subr.mxu0 0.0
  %738 = vmatpush1.msra.mxu0 0.0
  %739 = vmatprep.subr.mxu0 0.0
  %740 = vmatpush1.msra.mxu0 0.0
  %741 = vmatprep.subr.mxu0 0.0
  %742 = vmatpush1.msra.mxu0 0.0
  %743 = vmatprep.subr.mxu0 0.0
  %744 = vmatpush1.msra.mxu0 0.0
  %745 = vmatprep.subr.mxu0 0.0
  %746 = vmatpush1.msra.mxu0 0.0
  %747 = vmatprep.subr.mxu0 0.0
  %748 = vmatpush1.msra.mxu0 0.0
  %749 = vmatprep.mubr.f32.mxu0 0.0
  %750 = vmatmul.mubr.f32.gmra.mrb[0].mxu0 %v638
  %v751 = vpop.f32.mrb[0].mxu0
  %v752 = vadd.f32 %v635, %v751
  %v753 = vpop.f32.mrb[0].mxu0
  %754 = vmatprep.mubr.f32.mxu0 0.0
  %755 = vmatmul.mubr.f32.gmra.mrb[0].mxu0 %v641
  %v756 = vpop.f32.mrb[0].mxu0
  %v757 = vadd.f32 %v635, %v756
  %v758 = vpop.f32.mrb[0].mxu0
  %759 = vmatprep.mubr.f32.mxu0 0.0
  %760 = vmatmul.mubr.f32.gmra.mrb[0].mxu0 %v644
  %v761 = vpop.f32.mrb[0].mxu0
  %v762 = vadd.f32 %v635, %v761
  %v763 = vpop.f32.mrb[0].mxu0
  %764 = vmatprep.mubr.f32.mxu0 0.0
  %765 = vmatmul.mubr.f32.gmra.mrb[0].mxu0 %v647
  %v766 = vpop.f32.mrb[0].mxu0
  %v767 = vadd.f32 %v635, %v766
  %v768 = vpop.f32.mrb[0].mxu0
  %769 = vmatprep.mubr.f32.mxu0 0.0
  %770 = vmatmul.mubr.f32.gmra.mrb[0].mxu0 %v650
  %v771 = vpop.f32.mrb[0].mxu0
  %v772 = vadd.f32 %v635, %v771
  %v773 = vpop.f32.mrb[0].mxu0
  %774 = vmatprep.mubr.f32.mxu0 0.0
  %775 = vmatmul.mubr.f32.gmra.mrb[0].mxu0 %v653
  %v776 = vpop.f32.mrb[0].mxu0
  %v777 = vadd.f32 %v635, %v776
  %v778 = vpop.f32.mrb[0].mxu0
  %779 = vmatprep.mubr.f32.mxu0 0.0
  %780 = vmatmul.mubr.f32.gmra.mrb[0].mxu0 %v656
  %v781 = vpop.f32.mrb[0].mxu0
  %v782 = vadd.f32 %v635, %v781
  %v783 = vpop.f32.mrb[0].mxu0
  %784 = vmatprep.mubr.f32.mxu0 0.0
  %785 = vmatmul.mubr.f32.gmra.mrb[0].mxu0 %v659
  %v786 = vpop.f32.mrb[0].mxu0
  %v787 = vadd.f32 %v635, %v786
  %v788 = vpop.f32.mrb[0].mxu0
  %789 = vmatprep.mubr.f32.mxu0 0.0
  %790 = vmatmul.mubr.f32.gmra.mrb[0].mxu0 %v662
  %v791 = vpop.f32.mrb[0].mxu0
  %v792 = vadd.f32 %v635, %v791
  %v793 = vpop.f32.mrb[0].mxu0
  %794 = vmatprep.mubr.f32.mxu0 0.0
  %795 = vmatmul.mubr.f32.gmra.mrb[0].mxu0 %v665
  %v796 = vpop.f32.mrb[0].mxu0
  %v797 = vadd.f32 %v635, %v796
  %v798 = vpop.f32.mrb[0].mxu0
  %799 = vmatprep.mubr.f32.mxu0 0.0
  %800 = vmatmul.mubr.f32.gmra.mrb[0].mxu0 %v668
  %v801 = vpop.f32.mrb[0].mxu0
  %v802 = vadd.f32 %v635, %v801
  %v803 = vpop.f32.mrb[0].mxu0
  %804 = vmatprep.mubr.f32.mxu0 0.0
  %805 = vmatmul.mubr.f32.gmra.mrb[0].mxu0 %v671
  %v806 = vpop.f32.mrb[0].mxu0
  %v807 = vadd.f32 %v635, %v806
  %v808 = vpop.f32.mrb[0].mxu0
  %809 = vmatprep.mubr.f32.mxu0 0.0
  %810 = vmatmul.mubr.f32.gmra.mrb[0].mxu0 %v674
  %v811 = vpop.f32.mrb[0].mxu0
  %v812 = vadd.f32 %v635, %v811
  %v813 = vpop.f32.mrb[0].mxu0
  %814 = vmatprep.mubr.f32.mxu0 0.0
  %815 = vmatmul.mubr.f32.gmra.mrb[0].mxu0 %v677
  %v816 = vpop.f32.mrb[0].mxu0
  %v817 = vadd.f32 %v635, %v816
  %v818 = vpop.f32.mrb[0].mxu0
  %819 = vmatprep.mubr.f32.mxu0 0.0
  %820 = vmatmul.mubr.f32.gmra.mrb[0].mxu0 %v680
  %v821 = vpop.f32.mrb[0].mxu0
  %v822 = vadd.f32 %v635, %v821
  %v823 = vpop.f32.mrb[0].mxu0
  %824 = vmatprep.mubr.f32.mxu0 0.0
  %825 = vmatmul.mubr.f32.gmra.mrb[0].mxu0 %v683
  %v826 = vpop.f32.mrb[0].mxu0
  %v827 = vadd.f32 %v635, %v826
  %v828 = vpop.f32.mrb[0].mxu0
  %829 = vdwg.mxu0
  %830 = vst.msk [vmem:[%s9] sm:$0xff] %vm168, %v752
  %831 = vst.msk [vmem:[%s9 + $0x8] sm:$0xff] %vm168, %v757
  %832 = vst.msk [vmem:[%s9 + $0x10] sm:$0xff] %vm168, %v762
  %833 = vst.msk [vmem:[%s9 + $0x18] sm:$0xff] %vm168, %v767
  %834 = vst.msk [vmem:[%s9 + $0x20] sm:$0xff] %vm168, %v772
  %835 = vst.msk [vmem:[%s9 + $0x28] sm:$0xff] %vm168, %v777
  %836 = vst.msk [vmem:[%s9 + $0x30] sm:$0xff] %vm168, %v782
  %837 = vst.msk [vmem:[%s9 + $0x38] sm:$0xff] %vm168, %v787
  %838 = vst.msk [vmem:[%s9 + $0x40] sm:$0xff] %vm168, %v792
  %839 = vst.msk [vmem:[%s9 + $0x48] sm:$0xff] %vm168, %v797
  %840 = vst.msk [vmem:[%s9 + $0x50] sm:$0xff] %vm168, %v802
  %841 = vst.msk [vmem:[%s9 + $0x58] sm:$0xff] %vm168, %v807
  %842 = vst.msk [vmem:[%s9 + $0x60] sm:$0xff] %vm168, %v812
  %843 = vst.msk [vmem:[%s9 + $0x68] sm:$0xff] %vm168, %v817
  %844 = vst.msk [vmem:[%s9 + $0x70] sm:$0xff] %vm168, %v822
  %845 = vst.msk [vmem:[%s9 + $0x78] sm:$0xff] %vm168, %v827
  // Predicated region
  $region38: #{tpu_custom_call.1} parent=0 // pred_check
    _
  $region39: #{tpu_custom_call.1} parent=0 // pred_check_branch
    %847 = sbr.rel (0) target = $region41
  $region40: #{tpu_custom_call.1} parent=0 // pred_region
    _
  $region41: #{tpu_custom_call.1} parent=0 // pred_fallthru
    _
  // Predicated region
  $region42: #{tpu_custom_call.1} parent=0 // pred_check
    _
  $region43: #{tpu_custom_call.1} parent=0 // pred_check_branch
    %849 = sbr.rel (0) target = $region45
  $region44: #{tpu_custom_call.1} parent=0 // pred_region
    _
  $region45: #{tpu_custom_call.1} parent=0 // pred_fallthru
    _

</llo_original>
